<compile_context>
chip_gen: v6e
topology: v6e:2x2x1
jax: 0.10.0
libtpu: 0.0.40
codegen_flags: <defaults>
</compile_context>

<pallas_src>
import functools

import jax
import jax.numpy as jnp
from jax import lax
from jax.experimental import pallas as pl
from jax.experimental.pallas import tpu as pltpu


def _round_up(x: int, m: int) -> int:
    return (x + m - 1) // m * m


# ----------------------------- Pallas kernel ------------------------------- #
def categorical_net_kernel(x_ref, wt_ref, b_ref, logits_ref, *, num_valid, apply_mask):
    # logits = x @ W^T + b   (MXU matmul, f32 accumulation)
    logits = jnp.dot(
        x_ref[...], wt_ref[...], preferred_element_type=jnp.float32
    ) + b_ref[...]

    # Padded lanes (class index >= num_valid) must not contribute to the
    # softmax normalization: push them to -inf-ish before the reduction.
    if apply_mask:
        lane = lax.broadcasted_iota(jnp.int32, logits.shape, dimension=1)
        logits = jnp.where(lane < num_valid, logits, jnp.float32(-1e30))

    # numerically-stable log-softmax along the last axis, matching
    # torch.distributions.Categorical's stored (normalized) logits.
    m = jnp.max(logits, axis=-1, keepdims=True)
    shifted = logits - m
    s = jnp.sum(jnp.exp(shifted), axis=-1, keepdims=True)
    logits_ref[...] = (shifted - jnp.log(s)).astype(logits_ref.dtype)


def categorical_net_forward(x, wt_pad, b_pad, num_outputs, *, block_b=256):
    """x: (B, K) f32; wt_pad: (K, Npad) pre-transposed/padded weight;
    b_pad: (1, Npad) padded bias.  Returns normalized logits (B, Npad);
    lanes >= num_outputs hold large-negative filler."""
    B, K = x.shape
    Kw, n_pad = wt_pad.shape
    assert Kw == K and b_pad.shape == (1, n_pad)

    # Batch tile: largest multiple of 8 (f32 sublane) up to block_b.
    tb = min(_round_up(B, 8), block_b)
    b_total = _round_up(B, tb)
    if b_total != B:
        x = jnp.pad(x, ((0, b_total - B), (0, 0)))

    kernel = functools.partial(
        categorical_net_kernel,
        num_valid=num_outputs,
        apply_mask=(n_pad != num_outputs),
    )

    logits_pad = pl.pallas_call(
        kernel,
        out_shape=jax.ShapeDtypeStruct((b_total, n_pad), jnp.float32),
        grid=(b_total // tb,),
        in_specs=[
            pl.BlockSpec((tb, K), lambda i: (i, 0)),      # batch-tiled, pipelined
            pl.BlockSpec((K, n_pad), lambda i: (0, 0)),   # VMEM-resident weight
            pl.BlockSpec((1, n_pad), lambda i: (0, 0)),   # VMEM-resident bias
        ],
        out_specs=pl.BlockSpec((tb, n_pad), lambda i: (i, 0)),  # lane-dense store
        compiler_params=pltpu.CompilerParams(
            dimension_semantics=("parallel",),            # megacore on v7x
            vmem_limit_bytes=48 * 1024 * 1024,            # safe on v7x 64 MiB VMEM
        ),
    )(x, wt_pad, b_pad)

    return logits_pad[:B]


# --------------------- CustomFixedCategorical equivalent ------------------- #
class CustomFixedCategorical:
    """JAX-side mirror of the torch distribution wrapper (glue, not hot path).

    Holds the lane-padded normalized logits; padded lanes are ~-1e30 so
    argmax / gumbel-max / gathers on real actions are unaffected."""

    def __init__(self, logits_padded, num_outputs):
        self._logits_padded = logits_padded
        self.num_outputs = num_outputs

    @property
    def logits(self):
        return self._logits_padded[:, : self.num_outputs]

    @property
    def probs(self):
        # exp(normalized logits) == softmax; computed lazily, never stored by the kernel.
        return jnp.exp(self.logits)

    def sample(self, key):
        # Gumbel-max on padded logits; unsqueeze(-1) like the torch wrapper.
        g = -jnp.log(
            -jnp.log(jax.random.uniform(key, self._logits_padded.shape) + 1e-20) + 1e-20
        )
        return jnp.argmax(self._logits_padded + g, axis=-1)[..., None]

    def log_probs(self, actions):
        a = actions.squeeze(-1)
        lp = jnp.take_along_axis(self._logits_padded, a[..., None], axis=-1).squeeze(-1)
        return lp.reshape(actions.shape[0], -1).sum(-1)[..., None]

    def mode(self):
        # argmax(probs) == argmax(logits); avoid materializing probs.
        return jnp.argmax(self._logits_padded, axis=-1, keepdims=True)


# ----------------------------- parameter init ------------------------------ #
def init_params(key, num_inputs, num_outputs, gain=0.01):
    """orthogonal_(weight, gain=0.01), constant_(bias, 0).  The weight is
    pre-transposed and lane-padded ONCE here (not per forward call)."""
    w = jax.nn.initializers.orthogonal(scale=gain)(
        key, (num_outputs, num_inputs), jnp.float32
    )
    b = jnp.zeros((num_outputs,), jnp.float32)

    n_pad = _round_up(num_outputs, 128)
    wt_pad = jnp.zeros((num_inputs, n_pad), jnp.float32).at[:, :num_outputs].set(w.T)
    b_pad = jnp.zeros((1, n_pad), jnp.float32).at[:, :num_outputs].set(b)
    return w, b, wt_pad, b_pad


# ---------------------------------- main ----------------------------------- #
if __name__ == "__main__":
    key = jax.random.PRNGKey(0)
    k_x, k_w, k_s = jax.random.split(key, 3)

    batch = 8
    num_inputs = 32
    num_outputs = 16

    x = jax.random.normal(k_x, (batch, num_inputs), jnp.float32)
    weight, bias, wt_pad, b_pad = init_params(k_w, num_inputs, num_outputs)

    logits_padded = categorical_net_forward(x, wt_pad, b_pad, num_outputs)
    dist = CustomFixedCategorical(logits_padded, num_outputs)

    actions = dist.mode()
    lp = dist.log_probs(actions)
    samp = dist.sample(k_s)

    jax.block_until_ready((logits_padded, actions, lp, samp))

    # light sanity checks against pure-JAX reference
    ref_logits = x @ weight.T + bias
    ref_norm = ref_logits - jax.scipy.special.logsumexp(ref_logits, axis=-1, keepdims=True)
    ref_probs = jax.nn.softmax(ref_logits, axis=-1)

    assert jnp.allclose(dist.logits, ref_norm, atol=1e-5)
    assert jnp.allclose(dist.probs, ref_probs, atol=1e-5)
    assert jnp.array_equal(actions.squeeze(-1), jnp.argmax(ref_probs, axis=-1))
    assert dist.probs.shape == (batch, num_outputs)
    assert actions.shape == (batch, 1)
    assert lp.shape == (batch, 1)
    assert samp.shape == (batch, 1)
    assert bool(jnp.all((samp >= 0) & (samp < num_outputs)))

    # TODO(synk): at production shapes, cast x/weight to bf16 for the MXU
    # (keep f32 accumulation) and optionally fuse argmax/sample/gather into the
    # kernel epilogue; kept f32 + JAX-side glue here to preserve the 1e-5 check.

    print("KERNEL_OK")
</pallas_src>

<mosaic_0001>
module attributes {stable_mosaic.version = 11 : i64} {
  func.func @categorical_net_kernel(%arg0: i32, %arg1: memref<8x32xf32, #tpu.memory_space<vmem>>, %arg2: memref<32x128xf32, #tpu.memory_space<vmem>>, %arg3: memref<1x128xf32, #tpu.memory_space<vmem>>, %arg4: memref<8x128xf32, #tpu.memory_space<vmem>>) attributes {dimension_semantics = [#tpu.dimension_semantics<parallel>], iteration_bounds = array<i64: 1>, scalar_prefetch = 0 : i64, scratch_operands = 0 : i64, tpu.core_type = #tpu.core_type<tc>, window_params = [{transform_indices = @transform_0, window_bounds = array<i64: 8, 32>}, {pipeline_mode = #tpu.pipeline_mode<synchronous>, transform_indices = @transform_1, window_bounds = array<i64: 32, 128>}, {pipeline_mode = #tpu.pipeline_mode<synchronous>, transform_indices = @transform_2, window_bounds = array<i64: 1, 128>}, {transform_indices = @transform_3, window_bounds = array<i64: 8, 128>}]} {
    %c0 = arith.constant 0 : index
    %c0_0 = arith.constant 0 : index
    %0 = vector.load %arg1[%c0, %c0_0] : memref<8x32xf32, #tpu.memory_space<vmem>>, vector<8x32xf32>
    %c0_1 = arith.constant 0 : index
    %c0_2 = arith.constant 0 : index
    %1 = vector.load %arg2[%c0_1, %c0_2] : memref<32x128xf32, #tpu.memory_space<vmem>>, vector<32x128xf32>
    %cst = arith.constant dense<0.000000e+00> : vector<8x128xf32>
    %2 = tpu.matmul %0, %1, %cst {dimension_numbers = #tpu.dot_dimension_numbers<[1], [0], [0], [1], [0, 0, 1, 1], [], []>} : vector<8x32xf32>, vector<32x128xf32>, vector<8x128xf32> -> vector<8x128xf32>
    %c0_3 = arith.constant 0 : index
    %c0_4 = arith.constant 0 : index
    %3 = vector.load %arg3[%c0_3, %c0_4] : memref<1x128xf32, #tpu.memory_space<vmem>>, vector<1x128xf32>
    %4 = vector.broadcast %3 : vector<1x128xf32> to vector<8x128xf32>
    %5 = arith.addf %2, %4 : vector<8x128xf32>
    %6 = tpu.iota {dimensions = array<i32: 1>} : vector<8x128xi32>
    %c16_i32 = arith.constant 16 : i32
    %7 = vector.broadcast %c16_i32 : i32 to vector<8x128xi32>
    %8 = arith.cmpi slt, %6, %7 : vector<8x128xi32>
    %cst_5 = arith.constant -1.000000e+30 : f32
    %9 = vector.broadcast %cst_5 : f32 to vector<8x128xf32>
    %10 = arith.select %8, %5, %9 : vector<8x128xi1>, vector<8x128xf32>
    %cst_6 = arith.constant dense<0xFF800000> : vector<8xf32>
    %11 = vector.multi_reduction <maximumf>, %10, %cst_6 [1] : vector<8x128xf32> to vector<8xf32>
    %12 = vector.shape_cast %11 : vector<8xf32> to vector<8x1xf32>
    %13 = vector.broadcast %12 : vector<8x1xf32> to vector<8x128xf32>
    %14 = arith.subf %10, %13 : vector<8x128xf32>
    %15 = math.exp %14 : vector<8x128xf32>
    %cst_7 = arith.constant dense<0.000000e+00> : vector<8xf32>
    %16 = vector.multi_reduction <add>, %15, %cst_7 [1] : vector<8x128xf32> to vector<8xf32>
    %17 = vector.shape_cast %16 : vector<8xf32> to vector<8x1xf32>
    %18 = math.log %17 : vector<8x1xf32>
    %19 = vector.broadcast %18 : vector<8x1xf32> to vector<8x128xf32>
    %20 = arith.subf %14, %19 : vector<8x128xf32>
    %c0_8 = arith.constant 0 : index
    %c0_9 = arith.constant 0 : index
    %21 = vector.load %arg4[%c0_8, %c0_9] : memref<8x128xf32, #tpu.memory_space<vmem>>, vector<8x128xf32>
    tpu.vector_store %arg4[%c0_8, %c0_9], %20 {strides = array<i32>} : memref<8x128xf32, #tpu.memory_space<vmem>>, vector<8x128xf32>,
    return
  }
  func.func @transform_0(%arg0: i32) -> (i32, i32) {
    %c0_i32 = arith.constant 0 : i32
    %c0_i32_0 = arith.constant 0 : i32
    return %arg0, %c0_i32 : i32, i32
  }
  func.func @transform_1(%arg0: i32) -> (i32, i32) {
    %c0_i32 = arith.constant 0 : i32
    %c0_i32_0 = arith.constant 0 : i32
    %c0_i32_1 = arith.constant 0 : i32
    return %c0_i32, %c0_i32_0 : i32, i32
  }
  func.func @transform_2(%arg0: i32) -> (i32, i32) {
    %c0_i32 = arith.constant 0 : i32
    %c0_i32_0 = arith.constant 0 : i32
    %c0_i32_1 = arith.constant 0 : i32
    return %c0_i32, %c0_i32_0 : i32, i32
  }
  func.func @transform_3(%arg0: i32) -> (i32, i32) {
    %c0_i32 = arith.constant 0 : i32
    %c0_i32_0 = arith.constant 0 : i32
    return %arg0, %c0_i32 : i32, i32
  }
}

</mosaic_0001>

<llo_original>
// kernel: tpu_custom_call.1
$region0: #{tpu_custom_call.1}
  #allocation0 [shape = 'u32[]', space=smem, size = 0x4, offset = 0x4, fixed_abs, tag = 'smem constant byte address 0x4 - core index']
  #allocation1 [shape = 'u32[144,128]{1,0:T(1,128)}', space=vmem, size = 0x12000, scoped, tag = 'internal scratch']
  %s0 = inlined_call_operand.hbm [shape: f32[8,32], index: 0, kind: input, shape index: {}]
  %s1 = inlined_call_operand.hbm [shape: f32[32,128], index: 1, kind: input, shape index: {}]
  %s2 = inlined_call_operand.vmem [shape: f32[1,128], index: 2, kind: input, shape index: {}]
  %s3 = inlined_call_operand.hbm [shape: f32[8,128], index: 3, kind: output, shape index: {}]
  %s4 = sld [smem:[#allocation0]]
  $region30: #{tpu_custom_call.1} parent=0
    _
  %s6 = ssub.s32 1, %s4
  %s7 = scalar_select 0, %s6, %s4
  $region1: #{tpu_custom_call.1} parent=0
    #allocation2 [shape = 'u8[4096]{0}', space=vmem, size = 0x1000, scoped, tag = 'input window, operand 0, single buffered']
    #allocation3 [shape = 's32[1]{0}', space=sflag, size = 0x4, scoped, tag = 'scoped memory for tpu_custom_call.1']
    #allocation4 [shape = 's32[1]{0}', space=sflag, size = 0x4, scoped, tag = 'scoped memory for tpu_custom_call.1']
    #allocation5 [shape = 'u8[16384]{0}', space=vmem, size = 0x4000, scoped, tag = 'input window, operand 1, single buffered']
    #allocation6 [shape = 's32[1]{0}', space=sflag, size = 0x4, scoped, tag = 'scoped memory for tpu_custom_call.1']
    #allocation7 [shape = 'u8[4096]{0}', space=vmem, size = 0x1000, scoped, tag = 'output window, operand 0, single buffered']
    %8 = vsyncpa [#allocation3], 0
    %9 = vsyncpa [#allocation6], 0
    %10 = vsyncpa [#allocation4], 0
    // Predicated region
    $region2: #{tpu_custom_call.1} parent=1 // pred_check
      _
    $region3: #{tpu_custom_call.1} parent=1 // pred_check_branch
      %12 = sbr.rel (0) target = $region5
    $region4: #{tpu_custom_call.1} parent=1 // pred_region
      %s14 = ssub.s32 128, 128
      %15 = vsyncadd [#allocation3], %s14
      %s17 = sshll.u32 [#allocation2], 4
      %s18 = int_to_ptr.vmem [resolvable:$true] %s17
      %20 = dma.hbm_to_vmem [thread:$0]  %s0, 128, %s18, [#allocation3]
    $region5: #{tpu_custom_call.1} parent=1 // pred_fallthru
      _
    // Predicated region
    $region6: #{tpu_custom_call.1} parent=1 // pred_check
      _
    $region7: #{tpu_custom_call.1} parent=1 // pred_check_branch
      %22 = sbr.rel (0) target = $region9
    $region8: #{tpu_custom_call.1} parent=1 // pred_region
      %s24 = ssub.s32 512, 512
      %25 = vsyncadd [#allocation6], %s24
      %s26 = sshll.u32 [#allocation5], 4
      %s27 = int_to_ptr.vmem [resolvable:$true] %s26
      %32 = dma.hbm_to_vmem [thread:$0]  %s1, 512, %s27, [#allocation6], 128, 128, 8
    $region9: #{tpu_custom_call.1} parent=1 // pred_fallthru
      _
    // Predicated region
    $region10: #{tpu_custom_call.1} parent=1 // pred_check
      _
    $region11: #{tpu_custom_call.1} parent=1 // pred_check_branch
      %34 = sbr.rel (0) target = $region13
    $region12: #{tpu_custom_call.1} parent=1 // pred_region
      _
    $region13: #{tpu_custom_call.1} parent=1 // pred_fallthru
      _
    // Predicated region
    $region14: #{tpu_custom_call.1} parent=1 // pred_check
      _
    $region15: #{tpu_custom_call.1} parent=1 // pred_check_branch
      %36 = sbr.rel (0) target = $region17
    $region16: #{tpu_custom_call.1} parent=1 // pred_region
      %37 = dma.done [#allocation3], 128
    $region17: #{tpu_custom_call.1} parent=1 // pred_fallthru
      _
    // Predicated region
    $region18: #{tpu_custom_call.1} parent=1 // pred_check
      _
    $region19: #{tpu_custom_call.1} parent=1 // pred_check_branch
      %39 = sbr.rel (0) target = $region21
    $region20: #{tpu_custom_call.1} parent=1 // pred_region
      %40 = dma.done [#allocation6], 512
    $region21: #{tpu_custom_call.1} parent=1 // pred_fallthru
      _
    %v41 = vld [vmem:[#allocation2] sm:$0xff]
    %v42 = vld [vmem:[#allocation5] sm:$0xff]
    %v43 = vld [vmem:[#allocation5 + $0x8] sm:$0xff]
    %v44 = vld [vmem:[#allocation5 + $0x10] sm:$0xff]
    %v45 = vld [vmem:[#allocation5 + $0x18] sm:$0xff]
    %v46 = vld [vmem:[%s2] sm:$0x1]
    %v48 = vlaneseq
    %v49 = vshrl.u32 %v48, 7
    %v50 = vsub.s32 0, %v49
    %v51 = vrot.slane %v46, %v50
    %vm53 = vcmask 261120
    %v55 = vsel %vm53, %v41, 0
    %57 = vmatprep.subr.mxu0 0.0
    %58 = vmatpush1.msra.mxu0 0.0
    %59 = vmatprep.subr.mxu0 0.0
    %60 = vmatpush1.msra.mxu0 0.0
    %61 = vmatprep.subr.mxu0 0.0
    %62 = vmatpush1.msra.mxu0 0.0
    %63 = vmatprep.subr.mxu0 0.0
    %64 = vmatpush1.msra.mxu0 0.0
    %65 = vmatprep.subr.mxu0 0.0
    %66 = vmatpush1.msra.mxu0 0.0
    %67 = vmatprep.subr.mxu0 0.0
    %68 = vmatpush1.msra.mxu0 0.0
    %69 = vmatprep.subr.mxu0 0.0
    %70 = vmatpush1.msra.mxu0 0.0
    %71 = vmatprep.subr.mxu0 0.0
    %72 = vmatpush1.msra.mxu0 0.0
    %73 = vmatprep.subr.mxu0 0.0
    %74 = vmatpush1.msra.mxu0 0.0
    %75 = vmatprep.subr.mxu0 0.0
    %76 = vmatpush1.msra.mxu0 0.0
    %77 = vmatprep.subr.mxu0 0.0
    %78 = vmatpush1.msra.mxu0 0.0
    %79 = vmatprep.subr.mxu0 0.0
    %80 = vmatpush1.msra.mxu0 0.0
    %81 = vmatprep.subr.mxu0 0.0
    %82 = vmatpush1.msra.mxu0 %v45
    %83 = vmatprep.subr.mxu0 0.0
    %84 = vmatpush1.msra.mxu0 %v44
    %85 = vmatprep.subr.mxu0 0.0
    %86 = vmatpush1.msra.mxu0 %v43
    %87 = vmatprep.subr.mxu0 0.0
    %88 = vmatpush1.msra.mxu0 %v42
    %89 = vmatprep.subr.mxu0 0.0
    %90 = vmatpush2.msra.mxu0 0.0
    %91 = vmatprep.subr.mxu0 0.0
    %92 = vmatpush2.msra.mxu0 0.0
    %93 = vmatprep.subr.mxu0 0.0
    %94 = vmatpush2.msra.mxu0 0.0
    %95 = vmatprep.subr.mxu0 0.0
    %96 = vmatpush2.msra.mxu0 0.0
    %97 = vmatprep.subr.mxu0 0.0
    %98 = vmatpush2.msra.mxu0 0.0
    %99 = vmatprep.subr.mxu0 0.0
    %100 = vmatpush2.msra.mxu0 0.0
    %101 = vmatprep.subr.mxu0 0.0
    %102 = vmatpush2.msra.mxu0 0.0
    %103 = vmatprep.subr.mxu0 0.0
    %104 = vmatpush2.msra.mxu0 0.0
    %105 = vmatprep.subr.mxu0 0.0
    %106 = vmatpush2.msra.mxu0 0.0
    %107 = vmatprep.subr.mxu0 0.0
    %108 = vmatpush2.msra.mxu0 0.0
    %109 = vmatprep.subr.mxu0 0.0
    %110 = vmatpush2.msra.mxu0 0.0
    %111 = vmatprep.subr.mxu0 0.0
    %112 = vmatpush2.msra.mxu0 0.0
    %113 = vmatprep.subr.mxu0 0.0
    %114 = vmatpush2.msra.mxu0 0.0
    %115 = vmatprep.subr.mxu0 0.0
    %116 = vmatpush2.msra.mxu0 0.0
    %117 = vmatprep.subr.mxu0 0.0
    %118 = vmatpush2.msra.mxu0 0.0
    %119 = vmatprep.subr.mxu0 0.0
    %120 = vmatpush2.msra.mxu0 0.0
    %121 = vmatprep.mubr.f32.mxu0 0.0
    %122 = vmatmul.mubr.f32.gmra.mxu0 %v55
    %v123 = vpop.f32.mrf.mxu0
    %v124 = vadd.f32 %v51, %v123
    %v125 = vpop.f32.mrf.mxu0
    %126 = vdwg.mxu0
    %v127 = vlaneseq
    %v128 = vand.u32 %v127, 127
    %vm129 = vcmp.lt.s32.totalorder %v128, 16
    %v130 = vsel %vm129, %v124, -1e+30
    %131 = vmax.xlane.f32.xlu0 %v130
    %v132 = vpop.xlane.xlu0 %131
    %v133 = vsub.f32 %v130, %v132
    %v134 = vmul.f32 %v133, 1.442695
    %v135 = vpow.pop %v134
    %136 = vadd.xlane.f32.xlu0 %v135
    %v137 = vpop.xlane.xlu0 %136
    %v138 = vlog2.pop %v137
    %v139 = vmul.f32 %v138, 0.6931472
    %v140 = vsub.f32 %v133, %v139
    %141 = vst [vmem:[#allocation7] sm:$0xff] %v140
    // Predicated region
    $region22: #{tpu_custom_call.1} parent=1 // pred_check
      _
    $region23: #{tpu_custom_call.1} parent=1 // pred_check_branch
      %143 = sbr.rel (0) target = $region25
    $region24: #{tpu_custom_call.1} parent=1 // pred_region
      %s145 = ssub.s32 128, 128
      %146 = vsyncadd [#allocation4], %s145
      %s148 = sshll.u32 [#allocation7], 4
      %s149 = int_to_ptr.vmem [resolvable:$true] %s148
      %151 = dma.vmem_to_hbm [thread:$0]  %s149, 128, %s3, [#allocation4]
    $region25: #{tpu_custom_call.1} parent=1 // pred_fallthru
      _
    // Predicated region
    $region26: #{tpu_custom_call.1} parent=1 // pred_check
      _
    $region27: #{tpu_custom_call.1} parent=1 // pred_check_branch
      %153 = sbr.rel (0) target = $region29
    $region28: #{tpu_custom_call.1} parent=1 // pred_region
      %154 = dma.done [#allocation4], 128
    $region29: #{tpu_custom_call.1} parent=1 // pred_fallthru
      _
    %155 = vsyncpa [#allocation3], 1
    %156 = vsyncpa [#allocation6], 1
    %157 = vsyncpa [#allocation4], 1

</llo_original>
